<compile_context>
chip_gen: v6e
topology: v6e:2x2x1
jax: 0.10.0
libtpu: 0.0.40
codegen_flags: <defaults>
</compile_context>

<pallas_src>
import functools

import jax
import jax.numpy as jnp
from jax.experimental import pallas as pl
from jax.experimental.pallas import tpu as pltpu


def _mlp_kernel(x_ref, w1_ref, b1_ref, w2_ref, b2_ref, w3_ref, b3_ref,
                w4_ref, b4_ref, o_ref, *, compute_dtype):
    # Transposed dataflow: activations are (features, TB); batch on the lanes.
    x = x_ref[...]                                               # (6, TB) f32

    # ---- Layer 1 (BN folded in): K=6 contraction as 6 broadcasted VPU FMAs.
    # A (64,6) weight would use <1% of a 256-wide MXU yet consume a full
    # column stream; the VALU slots have slack here.
    w1 = w1_ref[...]                                             # (64, 6) f32
    a1 = w1[:, 0:1] * x[0:1, :]                                  # (64, TB) f32
    for k in range(1, 6):                                        # static unroll
        a1 = a1 + w1[:, k:k + 1] * x[k:k + 1, :]
    h = jnp.tanh(a1.astype(compute_dtype) + b1_ref[...])         # (64, TB)

    # ---- Layers 2/3 on the MXU (f32 accumulation); bias+tanh in compute dtype.
    a2 = jnp.dot(w2_ref[...], h, preferred_element_type=jnp.float32)
    h = jnp.tanh(a2.astype(compute_dtype) + b2_ref[...])         # (128, TB)
    a3 = jnp.dot(w3_ref[...], h, preferred_element_type=jnp.float32)
    h = jnp.tanh(a3.astype(compute_dtype) + b3_ref[...])         # (64, TB)

    # ---- Final Linear(64,1): VPU multiply + sublane reduce, then a
    # numerically-safe sigmoid (0.5*(1+tanh(x/2))).  Output (1, TB) lane-dense.
    logits = jnp.sum(h.astype(jnp.float32) * w4_ref[...], axis=0,
                     keepdims=True) + b4_ref[...]                # (1, TB) f32
    o_ref[...] = (0.5 * (jnp.tanh(0.5 * logits) + 1.0)).astype(o_ref.dtype)


@functools.partial(jax.jit,
                   static_argnames=("block_batch", "use_bf16", "features_major"))
def reachability_predictor(x, params, *, block_batch=4096, use_bf16=True,
                           features_major=False):
    """x: (N, 6) float32 (or (6, N) if features_major). Returns (N, 1) probs."""
    if features_major:
        F, N = x.shape
        x_t = x.astype(jnp.float32)                              # already (6, N)
    else:
        N, F = x.shape
        x_t = x.astype(jnp.float32).T                            # (6, N)
    assert F == 6, "ReachabilityPredictor expects 6 input features"

    # --- fold BatchNorm (inference, running stats) into the first Linear -----
    eps = 1e-5
    bn_scale = params["bn_gamma"] / jnp.sqrt(params["bn_var"] + eps)   # (6,)
    bn_shift = params["bn_beta"] - params["bn_mean"] * bn_scale        # (6,)

    compute_dtype = jnp.bfloat16 if use_bf16 else jnp.float32

    w1 = params["w1"] * bn_scale[None, :]                              # (64,6) f32
    b1 = (params["w1"] @ bn_shift + params["b1"]).reshape(64, 1).astype(compute_dtype)
    w2 = params["w2"].astype(compute_dtype)                            # (128,64)
    b2 = params["b2"].reshape(128, 1).astype(compute_dtype)
    w3 = params["w3"].astype(compute_dtype)                            # (64,128)
    b3 = params["b3"].reshape(64, 1).astype(compute_dtype)
    w4 = params["w4"].reshape(64, 1)                                   # (64,1) f32
    b4 = params["b4"].reshape(1, 1)                                    # (1,1) f32

    # Tiny batches: pad once to the 128-lane minimum so the single block is
    # fully in-bounds (negligible cost at this size).
    N_lanes = N
    if N < 128:
        N_lanes = 128
        x_t = jnp.pad(x_t, ((0, 0), (0, N_lanes - N)))

    # Batch tile: multiple of 128 lanes, large enough to amortize per-step
    # overhead, capped so the grid keeps >= 2 steps (v7x has 2 TensorCores).
    tb_req = max(128, ((block_batch + 127) // 128) * 128)
    half_cover = ((pl.cdiv(N_lanes, 2) + 127) // 128) * 128
    TB = max(128, min(tb_req, half_cover))
    grid = (pl.cdiv(N_lanes, TB),)   # may over-cover: Pallas masks the tail block

    def full_spec(arr):
        return pl.BlockSpec(arr.shape, lambda i: (0,) * arr.ndim)

    kernel = functools.partial(_mlp_kernel, compute_dtype=compute_dtype)

    out = pl.pallas_call(
        kernel,
        out_shape=jax.ShapeDtypeStruct((1, N_lanes), jnp.float32),
        grid_spec=pltpu.PrefetchScalarGridSpec(
            num_scalar_prefetch=0,
            grid=grid,
            in_specs=[
                pl.BlockSpec((6, TB), lambda i: (0, i)),   # x tile (lane-dense)
                full_spec(w1), full_spec(b1),
                full_spec(w2), full_spec(b2),
                full_spec(w3), full_spec(b3),
                full_spec(w4), full_spec(b4),
            ],
            out_specs=pl.BlockSpec((1, TB), lambda i: (0, i)),
        ),
        compiler_params=pltpu.CompilerParams(
            dimension_semantics=("parallel",)),
    )(x_t, w1, b1, w2, b2, w3, b3, w4, b4)

    return out[0, :N].reshape(N, 1)


def init_params(key):
    """Deterministic synthetic parameters matching the PyTorch module's shapes."""
    ks = jax.random.split(key, 12)

    def lin(kw, kb, out_f, in_f):
        bound = 1.0 / jnp.sqrt(in_f)
        w = jax.random.uniform(kw, (out_f, in_f), jnp.float32, -bound, bound)
        b = jax.random.uniform(kb, (out_f,), jnp.float32, -bound, bound)
        return w, b

    w1, b1 = lin(ks[0], ks[1], 64, 6)
    w2, b2 = lin(ks[2], ks[3], 128, 64)
    w3, b3 = lin(ks[4], ks[5], 64, 128)
    w4, b4 = lin(ks[6], ks[7], 1, 64)

    return dict(
        bn_gamma=jax.random.uniform(ks[8], (6,), jnp.float32, 0.5, 1.5),
        bn_beta=jax.random.uniform(ks[9], (6,), jnp.float32, -0.5, 0.5),
        bn_mean=jax.random.normal(ks[10], (6,), jnp.float32) * 0.1,
        bn_var=jax.random.uniform(ks[11], (6,), jnp.float32, 0.5, 1.5),
        w1=w1, b1=b1, w2=w2, b2=b2, w3=w3, b3=b3, w4=w4, b4=b4,
    )


def _reference(x, params):
    """Pure-JAX reference for sanity checking (matches the PyTorch forward)."""
    eps = 1e-5
    h = (x - params["bn_mean"]) / jnp.sqrt(params["bn_var"] + eps)
    h = h * params["bn_gamma"] + params["bn_beta"]
    h = jnp.tanh(h @ params["w1"].T + params["b1"])
    h = jnp.tanh(h @ params["w2"].T + params["b2"])
    h = jnp.tanh(h @ params["w3"].T + params["b3"])
    return jax.nn.sigmoid(h @ params["w4"].T + params["b4"])


if __name__ == "__main__":
    key = jax.random.PRNGKey(0)
    k_param, k_x1, k_x2 = jax.random.split(key, 3)
    params = init_params(k_param)

    # 1) Small batch, full-f32 path: tight check vs. reference (exercises the
    #    N < 128 single-tile path).
    x_small = jax.random.normal(k_x1, (8, 6), jnp.float32)
    y_f32 = jax.block_until_ready(
        reachability_predictor(x_small, params, use_bf16=False))
    y_ref_small = _reference(x_small, params)
    assert y_f32.shape == (8, 1)
    assert jnp.allclose(y_f32, y_ref_small, atol=1e-4, rtol=1e-4), (y_f32, y_ref_small)

    # 2) Default path (bf16 tanh layers), N=300: TB capped at 256 so the grid
    #    has 2 steps and the last block is partial (masked tail store).
    x_big = jax.random.normal(k_x2, (300, 6), jnp.float32)
    y_bf16 = jax.block_until_ready(reachability_predictor(x_big, params))
    y_ref_big = _reference(x_big, params)
    assert y_bf16.shape == (300, 1)
    assert jnp.allclose(y_bf16, y_ref_big, atol=3e-2, rtol=3e-2), (y_bf16, y_ref_big)

    # 3) Same data with an explicit small tile: 3-step parallel grid.
    y_t128 = jax.block_until_ready(
        reachability_predictor(x_big, params, block_batch=128))
    assert jnp.allclose(y_t128, y_ref_big, atol=3e-2, rtol=3e-2)

    print("KERNEL_OK")
</pallas_src>

<mosaic_0001>
module attributes {stable_mosaic.version = 11 : i64} {
  func.func @_mlp_kernel(%arg0: i32, %arg1: memref<6x128xf32, #tpu.memory_space<vmem>>, %arg2: memref<64x6xf32, #tpu.memory_space<vmem>>, %arg3: memref<64x1xf32, #tpu.memory_space<vmem>>, %arg4: memref<128x64xf32, #tpu.memory_space<vmem>>, %arg5: memref<128x1xf32, #tpu.memory_space<vmem>>, %arg6: memref<64x128xf32, #tpu.memory_space<vmem>>, %arg7: memref<64x1xf32, #tpu.memory_space<vmem>>, %arg8: memref<64x1xf32, #tpu.memory_space<vmem>>, %arg9: memref<1x1xf32, #tpu.memory_space<vmem>>, %arg10: memref<1x128xf32, #tpu.memory_space<vmem>>) attributes {dimension_semantics = [#tpu.dimension_semantics<parallel>], iteration_bounds = array<i64: 1>, scalar_prefetch = 0 : i64, scratch_operands = 0 : i64, tpu.core_type = #tpu.core_type<tc>, window_params = [{transform_indices = @transform_0, window_bounds = array<i64: 6, 128>}, {pipeline_mode = #tpu.pipeline_mode<synchronous>, transform_indices = @transform_1, window_bounds = array<i64: 64, 6>}, {pipeline_mode = #tpu.pipeline_mode<synchronous>, transform_indices = @transform_2, window_bounds = array<i64: 64, 1>}, {pipeline_mode = #tpu.pipeline_mode<synchronous>, transform_indices = @transform_3, window_bounds = array<i64: 128, 64>}, {pipeline_mode = #tpu.pipeline_mode<synchronous>, transform_indices = @transform_4, window_bounds = array<i64: 128, 1>}, {pipeline_mode = #tpu.pipeline_mode<synchronous>, transform_indices = @transform_5, window_bounds = array<i64: 64, 128>}, {pipeline_mode = #tpu.pipeline_mode<synchronous>, transform_indices = @transform_6, window_bounds = array<i64: 64, 1>}, {pipeline_mode = #tpu.pipeline_mode<synchronous>, transform_indices = @transform_7, window_bounds = array<i64: 64, 1>}, {pipeline_mode = #tpu.pipeline_mode<synchronous>, transform_indices = @transform_8, window_bounds = array<i64: 1, 1>}, {transform_indices = @transform_9, window_bounds = array<i64: 1, 128>}]} {
    %c0 = arith.constant 0 : index
    %c0_0 = arith.constant 0 : index
    %0 = vector.load %arg1[%c0, %c0_0] : memref<6x128xf32, #tpu.memory_space<vmem>>, vector<6x128xf32>
    %c0_1 = arith.constant 0 : index
    %c0_2 = arith.constant 0 : index
    %1 = vector.load %arg2[%c0_1, %c0_2] : memref<64x6xf32, #tpu.memory_space<vmem>>, vector<64x6xf32>
    %2 = vector.extract_strided_slice %1 {offsets = [0, 0], sizes = [64, 1], strides = [1, 1]} : vector<64x6xf32> to vector<64x1xf32>
    %3 = vector.extract_strided_slice %0 {offsets = [0, 0], sizes = [1, 128], strides = [1, 1]} : vector<6x128xf32> to vector<1x128xf32>
    %4 = vector.broadcast %2 : vector<64x1xf32> to vector<64x128xf32>
    %5 = vector.broadcast %3 : vector<1x128xf32> to vector<64x128xf32>
    %6 = arith.mulf %4, %5 : vector<64x128xf32>
    %7 = vector.extract_strided_slice %1 {offsets = [0, 1], sizes = [64, 1], strides = [1, 1]} : vector<64x6xf32> to vector<64x1xf32>
    %8 = vector.extract_strided_slice %0 {offsets = [1, 0], sizes = [1, 128], strides = [1, 1]} : vector<6x128xf32> to vector<1x128xf32>
    %9 = vector.broadcast %7 : vector<64x1xf32> to vector<64x128xf32>
    %10 = vector.broadcast %8 : vector<1x128xf32> to vector<64x128xf32>
    %11 = arith.mulf %9, %10 : vector<64x128xf32>
    %12 = arith.addf %6, %11 : vector<64x128xf32>
    %13 = vector.extract_strided_slice %1 {offsets = [0, 2], sizes = [64, 1], strides = [1, 1]} : vector<64x6xf32> to vector<64x1xf32>
    %14 = vector.extract_strided_slice %0 {offsets = [2, 0], sizes = [1, 128], strides = [1, 1]} : vector<6x128xf32> to vector<1x128xf32>
    %15 = vector.broadcast %13 : vector<64x1xf32> to vector<64x128xf32>
    %16 = vector.broadcast %14 : vector<1x128xf32> to vector<64x128xf32>
    %17 = arith.mulf %15, %16 : vector<64x128xf32>
    %18 = arith.addf %12, %17 : vector<64x128xf32>
    %19 = vector.extract_strided_slice %1 {offsets = [0, 3], sizes = [64, 1], strides = [1, 1]} : vector<64x6xf32> to vector<64x1xf32>
    %20 = vector.extract_strided_slice %0 {offsets = [3, 0], sizes = [1, 128], strides = [1, 1]} : vector<6x128xf32> to vector<1x128xf32>
    %21 = vector.broadcast %19 : vector<64x1xf32> to vector<64x128xf32>
    %22 = vector.broadcast %20 : vector<1x128xf32> to vector<64x128xf32>
    %23 = arith.mulf %21, %22 : vector<64x128xf32>
    %24 = arith.addf %18, %23 : vector<64x128xf32>
    %25 = vector.extract_strided_slice %1 {offsets = [0, 4], sizes = [64, 1], strides = [1, 1]} : vector<64x6xf32> to vector<64x1xf32>
    %26 = vector.extract_strided_slice %0 {offsets = [4, 0], sizes = [1, 128], strides = [1, 1]} : vector<6x128xf32> to vector<1x128xf32>
    %27 = vector.broadcast %25 : vector<64x1xf32> to vector<64x128xf32>
    %28 = vector.broadcast %26 : vector<1x128xf32> to vector<64x128xf32>
    %29 = arith.mulf %27, %28 : vector<64x128xf32>
    %30 = arith.addf %24, %29 : vector<64x128xf32>
    %31 = vector.extract_strided_slice %1 {offsets = [0, 5], sizes = [64, 1], strides = [1, 1]} : vector<64x6xf32> to vector<64x1xf32>
    %32 = vector.extract_strided_slice %0 {offsets = [5, 0], sizes = [1, 128], strides = [1, 1]} : vector<6x128xf32> to vector<1x128xf32>
    %33 = vector.broadcast %31 : vector<64x1xf32> to vector<64x128xf32>
    %34 = vector.broadcast %32 : vector<1x128xf32> to vector<64x128xf32>
    %35 = arith.mulf %33, %34 : vector<64x128xf32>
    %36 = arith.addf %30, %35 : vector<64x128xf32>
    %c0_3 = arith.constant 0 : index
    %c0_4 = arith.constant 0 : index
    %37 = vector.load %arg3[%c0_3, %c0_4] : memref<64x1xf32, #tpu.memory_space<vmem>>, vector<64x1xf32>
    %38 = vector.broadcast %37 : vector<64x1xf32> to vector<64x128xf32>
    %39 = arith.addf %36, %38 : vector<64x128xf32>
    %40 = math.tanh %39 : vector<64x128xf32>
    %c0_5 = arith.constant 0 : index
    %c0_6 = arith.constant 0 : index
    %41 = vector.load %arg4[%c0_5, %c0_6] : memref<128x64xf32, #tpu.memory_space<vmem>>, vector<128x64xf32>
    %cst = arith.constant dense<0.000000e+00> : vector<128x128xf32>
    %42 = tpu.matmul %41, %40, %cst {dimension_numbers = #tpu.dot_dimension_numbers<[1], [0], [0], [1], [0, 0, 1, 1], [], []>} : vector<128x64xf32>, vector<64x128xf32>, vector<128x128xf32> -> vector<128x128xf32>
    %c0_7 = arith.constant 0 : index
    %c0_8 = arith.constant 0 : index
    %43 = vector.load %arg5[%c0_7, %c0_8] : memref<128x1xf32, #tpu.memory_space<vmem>>, vector<128x1xf32>
    %44 = vector.broadcast %43 : vector<128x1xf32> to vector<128x128xf32>
    %45 = arith.addf %42, %44 : vector<128x128xf32>
    %46 = math.tanh %45 : vector<128x128xf32>
    %c0_9 = arith.constant 0 : index
    %c0_10 = arith.constant 0 : index
    %47 = vector.load %arg6[%c0_9, %c0_10] : memref<64x128xf32, #tpu.memory_space<vmem>>, vector<64x128xf32>
    %cst_11 = arith.constant dense<0.000000e+00> : vector<64x128xf32>
    %48 = tpu.matmul %47, %46, %cst_11 {dimension_numbers = #tpu.dot_dimension_numbers<[1], [0], [0], [1], [0, 0, 1, 1], [], []>} : vector<64x128xf32>, vector<128x128xf32>, vector<64x128xf32> -> vector<64x128xf32>
    %c0_12 = arith.constant 0 : index
    %c0_13 = arith.constant 0 : index
    %49 = vector.load %arg7[%c0_12, %c0_13] : memref<64x1xf32, #tpu.memory_space<vmem>>, vector<64x1xf32>
    %50 = vector.broadcast %49 : vector<64x1xf32> to vector<64x128xf32>
    %51 = arith.addf %48, %50 : vector<64x128xf32>
    %52 = math.tanh %51 : vector<64x128xf32>
    %c0_14 = arith.constant 0 : index
    %c0_15 = arith.constant 0 : index
    %53 = vector.load %arg8[%c0_14, %c0_15] : memref<64x1xf32, #tpu.memory_space<vmem>>, vector<64x1xf32>
    %54 = vector.broadcast %53 : vector<64x1xf32> to vector<64x128xf32>
    %55 = arith.mulf %52, %54 : vector<64x128xf32>
    %cst_16 = arith.constant dense<0.000000e+00> : vector<128xf32>
    %56 = vector.multi_reduction <add>, %55, %cst_16 [0] : vector<64x128xf32> to vector<128xf32>
    %57 = vector.shape_cast %56 : vector<128xf32> to vector<1x128xf32>
    %c0_17 = arith.constant 0 : index
    %c0_18 = arith.constant 0 : index
    %58 = vector.load %arg9[%c0_17, %c0_18] : memref<1x1xf32, #tpu.memory_space<vmem>>, vector<1x1xf32>
    %59 = vector.broadcast %58 : vector<1x1xf32> to vector<1x128xf32>
    %60 = arith.addf %57, %59 : vector<1x128xf32>
    %cst_19 = arith.constant 5.000000e-01 : f32
    %61 = vector.broadcast %cst_19 : f32 to vector<1x128xf32>
    %62 = arith.mulf %61, %60 : vector<1x128xf32>
    %63 = math.tanh %62 : vector<1x128xf32>
    %cst_20 = arith.constant 1.000000e+00 : f32
    %64 = vector.broadcast %cst_20 : f32 to vector<1x128xf32>
    %65 = arith.addf %63, %64 : vector<1x128xf32>
    %cst_21 = arith.constant 5.000000e-01 : f32
    %66 = vector.broadcast %cst_21 : f32 to vector<1x128xf32>
    %67 = arith.mulf %66, %65 : vector<1x128xf32>
    %c0_22 = arith.constant 0 : index
    %c0_23 = arith.constant 0 : index
    %68 = vector.load %arg10[%c0_22, %c0_23] : memref<1x128xf32, #tpu.memory_space<vmem>>, vector<1x128xf32>
    tpu.vector_store %arg10[%c0_22, %c0_23], %67 {strides = array<i32>} : memref<1x128xf32, #tpu.memory_space<vmem>>, vector<1x128xf32>,
    return
  }
  func.func @transform_0(%arg0: i32) -> (i32, i32) {
    %c0_i32 = arith.constant 0 : i32
    %c0_i32_0 = arith.constant 0 : i32
    return %c0_i32, %arg0 : i32, i32
  }
  func.func @transform_1(%arg0: i32) -> (i32, i32) {
    %c0_i32 = arith.constant 0 : i32
    %c0_i32_0 = arith.constant 0 : i32
    %c0_i32_1 = arith.constant 0 : i32
    return %c0_i32, %c0_i32_0 : i32, i32
  }
  func.func @transform_2(%arg0: i32) -> (i32, i32) {
    %c0_i32 = arith.constant 0 : i32
    %c0_i32_0 = arith.constant 0 : i32
    %c0_i32_1 = arith.constant 0 : i32
    return %c0_i32, %c0_i32_0 : i32, i32
  }
  func.func @transform_3(%arg0: i32) -> (i32, i32) {
    %c0_i32 = arith.constant 0 : i32
    %c0_i32_0 = arith.constant 0 : i32
    %c0_i32_1 = arith.constant 0 : i32
    return %c0_i32, %c0_i32_0 : i32, i32
  }
  func.func @transform_4(%arg0: i32) -> (i32, i32) {
    %c0_i32 = arith.constant 0 : i32
    %c0_i32_0 = arith.constant 0 : i32
    %c0_i32_1 = arith.constant 0 : i32
    return %c0_i32, %c0_i32_0 : i32, i32
  }
  func.func @transform_5(%arg0: i32) -> (i32, i32) {
    %c0_i32 = arith.constant 0 : i32
    %c0_i32_0 = arith.constant 0 : i32
    %c0_i32_1 = arith.constant 0 : i32
    return %c0_i32, %c0_i32_0 : i32, i32
  }
  func.func @transform_6(%arg0: i32) -> (i32, i32) {
    %c0_i32 = arith.constant 0 : i32
    %c0_i32_0 = arith.constant 0 : i32
    %c0_i32_1 = arith.constant 0 : i32
    return %c0_i32, %c0_i32_0 : i32, i32
  }
  func.func @transform_7(%arg0: i32) -> (i32, i32) {
    %c0_i32 = arith.constant 0 : i32
    %c0_i32_0 = arith.constant 0 : i32
    %c0_i32_1 = arith.constant 0 : i32
    return %c0_i32, %c0_i32_0 : i32, i32
  }
  func.func @transform_8(%arg0: i32) -> (i32, i32) {
    %c0_i32 = arith.constant 0 : i32
    %c0_i32_0 = arith.constant 0 : i32
    %c0_i32_1 = arith.constant 0 : i32
    return %c0_i32, %c0_i32_0 : i32, i32
  }
  func.func @transform_9(%arg0: i32) -> (i32, i32) {
    %c0_i32 = arith.constant 0 : i32
    %c0_i32_0 = arith.constant 0 : i32
    return %c0_i32, %arg0 : i32, i32
  }
}

</mosaic_0001>

<llo_original>
// kernel: reachability_predictor.1
$region0: #{reachability_predictor.1}
  #allocation0 [shape = 'u32[]', space=smem, size = 0x4, offset = 0x4, fixed_abs, tag = 'smem constant byte address 0x4 - core index']
  #allocation1 [shape = 'u32[144,128]{1,0:T(1,128)}', space=vmem, size = 0x12000, scoped, tag = 'internal scratch']
  #allocation2 [shape = 'f32[1,1]{1,0:T(1,128)S(1)}', space=vmem, size = 0x200, scoped, tag = 'scoped memory for reachability_predictor.1']
  %s0 = inlined_call_operand.vmem [shape: f32[6,128], index: 0, kind: input, shape index: {}]
  %s1 = inlined_call_operand.vmem [shape: f32[64,6], index: 1, kind: input, shape index: {}]
  %s2 = inlined_call_operand.vmem [shape: f32[64,1], index: 2, kind: input, shape index: {}]
  %s3 = inlined_call_operand.vmem [shape: f32[128,64], index: 3, kind: input, shape index: {}]
  %s4 = inlined_call_operand.vmem [shape: f32[128,1], index: 4, kind: input, shape index: {}]
  %s5 = inlined_call_operand.vmem [shape: f32[64,128], index: 5, kind: input, shape index: {}]
  %s6 = inlined_call_operand.vmem [shape: f32[64,1], index: 6, kind: input, shape index: {}]
  %s7 = inlined_call_operand.vmem [shape: f32[64,1], index: 7, kind: input, shape index: {}]
  %s8 = inlined_call_operand.<no memory space> [shape: f32[1,1], index: 8, kind: input, shape index: {}]
  %s9 = inlined_call_operand.vmem [shape: f32[1,128], index: 9, kind: output, shape index: {}]
  %s10 = sld [smem:[#allocation0]]
  $region46: #{reachability_predictor.1} parent=0
    _
  %s12 = ssub.s32 1, %s10
  %s13 = scalar_select 0, %s12, %s10
  %v14 = vstv %s8
  %15 = vst [vmem:[#allocation2] sm:$0x1] %v14
  // Predicated region
  $region2: #{reachability_predictor.1} parent=0 // pred_check
    _
  $region3: #{reachability_predictor.1} parent=0 // pred_check_branch
    %17 = sbr.rel (0) target = $region5
  $region4: #{reachability_predictor.1} parent=0 // pred_region
    _
  $region5: #{reachability_predictor.1} parent=0 // pred_fallthru
    _
  // Predicated region
  $region6: #{reachability_predictor.1} parent=0 // pred_check
    _
  $region7: #{reachability_predictor.1} parent=0 // pred_check_branch
    %19 = sbr.rel (0) target = $region9
  $region8: #{reachability_predictor.1} parent=0 // pred_region
    _
  $region9: #{reachability_predictor.1} parent=0 // pred_fallthru
    _
  // Predicated region
  $region10: #{reachability_predictor.1} parent=0 // pred_check
    _
  $region11: #{reachability_predictor.1} parent=0 // pred_check_branch
    %21 = sbr.rel (0) target = $region13
  $region12: #{reachability_predictor.1} parent=0 // pred_region
    _
  $region13: #{reachability_predictor.1} parent=0 // pred_fallthru
    _
  // Predicated region
  $region14: #{reachability_predictor.1} parent=0 // pred_check
    _
  $region15: #{reachability_predictor.1} parent=0 // pred_check_branch
    %23 = sbr.rel (0) target = $region17
  $region16: #{reachability_predictor.1} parent=0 // pred_region
    _
  $region17: #{reachability_predictor.1} parent=0 // pred_fallthru
    _
  // Predicated region
  $region18: #{reachability_predictor.1} parent=0 // pred_check
    _
  $region19: #{reachability_predictor.1} parent=0 // pred_check_branch
    %25 = sbr.rel (0) target = $region21
  $region20: #{reachability_predictor.1} parent=0 // pred_region
    _
  $region21: #{reachability_predictor.1} parent=0 // pred_fallthru
    _
  // Predicated region
  $region22: #{reachability_predictor.1} parent=0 // pred_check
    _
  $region23: #{reachability_predictor.1} parent=0 // pred_check_branch
    %27 = sbr.rel (0) target = $region25
  $region24: #{reachability_predictor.1} parent=0 // pred_region
    _
  $region25: #{reachability_predictor.1} parent=0 // pred_fallthru
    _
  // Predicated region
  $region26: #{reachability_predictor.1} parent=0 // pred_check
    _
  $region27: #{reachability_predictor.1} parent=0 // pred_check_branch
    %29 = sbr.rel (0) target = $region29
  $region28: #{reachability_predictor.1} parent=0 // pred_region
    _
  $region29: #{reachability_predictor.1} parent=0 // pred_fallthru
    _
  // Predicated region
  $region30: #{reachability_predictor.1} parent=0 // pred_check
    _
  $region31: #{reachability_predictor.1} parent=0 // pred_check_branch
    %31 = sbr.rel (0) target = $region33
  $region32: #{reachability_predictor.1} parent=0 // pred_region
    _
  $region33: #{reachability_predictor.1} parent=0 // pred_fallthru
    _
  // Predicated region
  $region34: #{reachability_predictor.1} parent=0 // pred_check
    _
  $region35: #{reachability_predictor.1} parent=0 // pred_check_branch
    %33 = sbr.rel (0) target = $region37
  $region36: #{reachability_predictor.1} parent=0 // pred_region
    _
  $region37: #{reachability_predictor.1} parent=0 // pred_fallthru
    _
  %v34 = vld [vmem:[%s0] sm:$0x3f]
  %v35 = vld [vmem:[%s1] sm:$0xff]
  %v36 = vld [vmem:[%s1 + $0x8] sm:$0xff]
  %v37 = vld [vmem:[%s1 + $0x10] sm:$0xff]
  %v38 = vld [vmem:[%s1 + $0x18] sm:$0xff]
  %v39 = vld [vmem:[%s1 + $0x20] sm:$0xff]
  %v40 = vld [vmem:[%s1 + $0x28] sm:$0xff]
  %v41 = vld [vmem:[%s1 + $0x30] sm:$0xff]
  %v42 = vld [vmem:[%s1 + $0x38] sm:$0xff]
  %44 = vset.pattern.permute.xlu0 0
  %45 = vperm.xlu0 %44, %v35
  %v46 = vpop.permute.xlu0 %45
  %49 = vset.pattern.permute.xlu0 0
  %50 = vperm.xlu0 %49, %v36
  %v51 = vpop.permute.xlu0 %50
  %54 = vset.pattern.permute.xlu0 0
  %55 = vperm.xlu0 %54, %v37
  %v56 = vpop.permute.xlu0 %55
  %59 = vset.pattern.permute.xlu0 0
  %60 = vperm.xlu0 %59, %v38
  %v61 = vpop.permute.xlu0 %60
  %64 = vset.pattern.permute.xlu0 0
  %65 = vperm.xlu0 %64, %v39
  %v66 = vpop.permute.xlu0 %65
  %69 = vset.pattern.permute.xlu0 0
  %70 = vperm.xlu0 %69, %v40
  %v71 = vpop.permute.xlu0 %70
  %74 = vset.pattern.permute.xlu0 0
  %75 = vperm.xlu0 %74, %v41
  %v76 = vpop.permute.xlu0 %75
  %79 = vset.pattern.permute.xlu0 0
  %80 = vperm.xlu0 %79, %v42
  %v81 = vpop.permute.xlu0 %80
  %v83 = vlaneseq
  %v84 = vshrl.u32 %v83, 7
  %v85 = vsub.s32 0, %v84
  %v86 = vrot.slane %v34, %v85
  %v87 = vmul.f32 %v46, %v86
  %v88 = vmul.f32 %v51, %v86
  %v89 = vmul.f32 %v56, %v86
  %v90 = vmul.f32 %v61, %v86
  %v91 = vmul.f32 %v66, %v86
  %v92 = vmul.f32 %v71, %v86
  %v93 = vmul.f32 %v76, %v86
  %v94 = vmul.f32 %v81, %v86
  %95 = vset.pattern.permute.xlu0 1
  %96 = vperm.xlu0 %95, %v35
  %v97 = vpop.permute.xlu0 %96
  %99 = vset.pattern.permute.xlu0 1
  %100 = vperm.xlu0 %99, %v36
  %v101 = vpop.permute.xlu0 %100
  %103 = vset.pattern.permute.xlu0 1
  %104 = vperm.xlu0 %103, %v37
  %v105 = vpop.permute.xlu0 %104
  %107 = vset.pattern.permute.xlu0 1
  %108 = vperm.xlu0 %107, %v38
  %v109 = vpop.permute.xlu0 %108
  %111 = vset.pattern.permute.xlu0 1
  %112 = vperm.xlu0 %111, %v39
  %v113 = vpop.permute.xlu0 %112
  %115 = vset.pattern.permute.xlu0 1
  %116 = vperm.xlu0 %115, %v40
  %v117 = vpop.permute.xlu0 %116
  %119 = vset.pattern.permute.xlu0 1
  %120 = vperm.xlu0 %119, %v41
  %v121 = vpop.permute.xlu0 %120
  %123 = vset.pattern.permute.xlu0 1
  %124 = vperm.xlu0 %123, %v42
  %v125 = vpop.permute.xlu0 %124
  %v127 = vlaneseq
  %v128 = vshrl.u32 %v127, 7
  %v129 = vsub.s32 1, %v128
  %v130 = vrot.slane %v34, %v129
  %v131 = vmul.f32 %v97, %v130
  %v132 = vmul.f32 %v101, %v130
  %v133 = vmul.f32 %v105, %v130
  %v134 = vmul.f32 %v109, %v130
  %v135 = vmul.f32 %v113, %v130
  %v136 = vmul.f32 %v117, %v130
  %v137 = vmul.f32 %v121, %v130
  %v138 = vmul.f32 %v125, %v130
  %v139 = vadd.f32 %v87, %v131
  %v140 = vadd.f32 %v88, %v132
  %v141 = vadd.f32 %v89, %v133
  %v142 = vadd.f32 %v90, %v134
  %v143 = vadd.f32 %v91, %v135
  %v144 = vadd.f32 %v92, %v136
  %v145 = vadd.f32 %v93, %v137
  %v146 = vadd.f32 %v94, %v138
  %147 = vset.pattern.permute.xlu0 2
  %148 = vperm.xlu0 %147, %v35
  %v149 = vpop.permute.xlu0 %148
  %151 = vset.pattern.permute.xlu0 2
  %152 = vperm.xlu0 %151, %v36
  %v153 = vpop.permute.xlu0 %152
  %155 = vset.pattern.permute.xlu0 2
  %156 = vperm.xlu0 %155, %v37
  %v157 = vpop.permute.xlu0 %156
  %159 = vset.pattern.permute.xlu0 2
  %160 = vperm.xlu0 %159, %v38
  %v161 = vpop.permute.xlu0 %160
  %163 = vset.pattern.permute.xlu0 2
  %164 = vperm.xlu0 %163, %v39
  %v165 = vpop.permute.xlu0 %164
  %167 = vset.pattern.permute.xlu0 2
  %168 = vperm.xlu0 %167, %v40
  %v169 = vpop.permute.xlu0 %168
  %171 = vset.pattern.permute.xlu0 2
  %172 = vperm.xlu0 %171, %v41
  %v173 = vpop.permute.xlu0 %172
  %175 = vset.pattern.permute.xlu0 2
  %176 = vperm.xlu0 %175, %v42
  %v177 = vpop.permute.xlu0 %176
  %v179 = vlaneseq
  %v180 = vshrl.u32 %v179, 7
  %v181 = vsub.s32 2, %v180
  %v182 = vrot.slane %v34, %v181
  %v183 = vmul.f32 %v149, %v182
  %v184 = vmul.f32 %v153, %v182
  %v185 = vmul.f32 %v157, %v182
  %v186 = vmul.f32 %v161, %v182
  %v187 = vmul.f32 %v165, %v182
  %v188 = vmul.f32 %v169, %v182
  %v189 = vmul.f32 %v173, %v182
  %v190 = vmul.f32 %v177, %v182
  %v191 = vadd.f32 %v139, %v183
  %v192 = vadd.f32 %v140, %v184
  %v193 = vadd.f32 %v141, %v185
  %v194 = vadd.f32 %v142, %v186
  %v195 = vadd.f32 %v143, %v187
  %v196 = vadd.f32 %v144, %v188
  %v197 = vadd.f32 %v145, %v189
  %v198 = vadd.f32 %v146, %v190
  %199 = vset.pattern.permute.xlu0 3
  %200 = vperm.xlu0 %199, %v35
  %v201 = vpop.permute.xlu0 %200
  %203 = vset.pattern.permute.xlu0 3
  %204 = vperm.xlu0 %203, %v36
  %v205 = vpop.permute.xlu0 %204
  %207 = vset.pattern.permute.xlu0 3
  %208 = vperm.xlu0 %207, %v37
  %v209 = vpop.permute.xlu0 %208
  %211 = vset.pattern.permute.xlu0 3
  %212 = vperm.xlu0 %211, %v38
  %v213 = vpop.permute.xlu0 %212
  %215 = vset.pattern.permute.xlu0 3
  %216 = vperm.xlu0 %215, %v39
  %v217 = vpop.permute.xlu0 %216
  %219 = vset.pattern.permute.xlu0 3
  %220 = vperm.xlu0 %219, %v40
  %v221 = vpop.permute.xlu0 %220
  %223 = vset.pattern.permute.xlu0 3
  %224 = vperm.xlu0 %223, %v41
  %v225 = vpop.permute.xlu0 %224
  %227 = vset.pattern.permute.xlu0 3
  %228 = vperm.xlu0 %227, %v42
  %v229 = vpop.permute.xlu0 %228
  %v231 = vlaneseq
  %v232 = vshrl.u32 %v231, 7
  %v233 = vsub.s32 3, %v232
  %v234 = vrot.slane %v34, %v233
  %v235 = vmul.f32 %v201, %v234
  %v236 = vmul.f32 %v205, %v234
  %v237 = vmul.f32 %v209, %v234
  %v238 = vmul.f32 %v213, %v234
  %v239 = vmul.f32 %v217, %v234
  %v240 = vmul.f32 %v221, %v234
  %v241 = vmul.f32 %v225, %v234
  %v242 = vmul.f32 %v229, %v234
  %v243 = vadd.f32 %v191, %v235
  %v244 = vadd.f32 %v192, %v236
  %v245 = vadd.f32 %v193, %v237
  %v246 = vadd.f32 %v194, %v238
  %v247 = vadd.f32 %v195, %v239
  %v248 = vadd.f32 %v196, %v240
  %v249 = vadd.f32 %v197, %v241
  %v250 = vadd.f32 %v198, %v242
  %251 = vset.pattern.permute.xlu0 4
  %252 = vperm.xlu0 %251, %v35
  %v253 = vpop.permute.xlu0 %252
  %255 = vset.pattern.permute.xlu0 4
  %256 = vperm.xlu0 %255, %v36
  %v257 = vpop.permute.xlu0 %256
  %259 = vset.pattern.permute.xlu0 4
  %260 = vperm.xlu0 %259, %v37
  %v261 = vpop.permute.xlu0 %260
  %263 = vset.pattern.permute.xlu0 4
  %264 = vperm.xlu0 %263, %v38
  %v265 = vpop.permute.xlu0 %264
  %267 = vset.pattern.permute.xlu0 4
  %268 = vperm.xlu0 %267, %v39
  %v269 = vpop.permute.xlu0 %268
  %271 = vset.pattern.permute.xlu0 4
  %272 = vperm.xlu0 %271, %v40
  %v273 = vpop.permute.xlu0 %272
  %275 = vset.pattern.permute.xlu0 4
  %276 = vperm.xlu0 %275, %v41
  %v277 = vpop.permute.xlu0 %276
  %279 = vset.pattern.permute.xlu0 4
  %280 = vperm.xlu0 %279, %v42
  %v281 = vpop.permute.xlu0 %280
  %v283 = vlaneseq
  %v284 = vshrl.u32 %v283, 7
  %v285 = vsub.s32 4, %v284
  %v286 = vrot.slane %v34, %v285
  %v287 = vmul.f32 %v253, %v286
  %v288 = vmul.f32 %v257, %v286
  %v289 = vmul.f32 %v261, %v286
  %v290 = vmul.f32 %v265, %v286
  %v291 = vmul.f32 %v269, %v286
  %v292 = vmul.f32 %v273, %v286
  %v293 = vmul.f32 %v277, %v286
  %v294 = vmul.f32 %v281, %v286
  %v295 = vadd.f32 %v243, %v287
  %v296 = vadd.f32 %v244, %v288
  %v297 = vadd.f32 %v245, %v289
  %v298 = vadd.f32 %v246, %v290
  %v299 = vadd.f32 %v247, %v291
  %v300 = vadd.f32 %v248, %v292
  %v301 = vadd.f32 %v249, %v293
  %v302 = vadd.f32 %v250, %v294
  %303 = vset.pattern.permute.xlu0 5
  %304 = vperm.xlu0 %303, %v35
  %v305 = vpop.permute.xlu0 %304
  %307 = vset.pattern.permute.xlu0 5
  %308 = vperm.xlu0 %307, %v36
  %v309 = vpop.permute.xlu0 %308
  %311 = vset.pattern.permute.xlu0 5
  %312 = vperm.xlu0 %311, %v37
  %v313 = vpop.permute.xlu0 %312
  %315 = vset.pattern.permute.xlu0 5
  %316 = vperm.xlu0 %315, %v38
  %v317 = vpop.permute.xlu0 %316
  %319 = vset.pattern.permute.xlu0 5
  %320 = vperm.xlu0 %319, %v39
  %v321 = vpop.permute.xlu0 %320
  %323 = vset.pattern.permute.xlu0 5
  %324 = vperm.xlu0 %323, %v40
  %v325 = vpop.permute.xlu0 %324
  %327 = vset.pattern.permute.xlu0 5
  %328 = vperm.xlu0 %327, %v41
  %v329 = vpop.permute.xlu0 %328
  %331 = vset.pattern.permute.xlu0 5
  %332 = vperm.xlu0 %331, %v42
  %v333 = vpop.permute.xlu0 %332
  %v335 = vlaneseq
  %v336 = vshrl.u32 %v335, 7
  %v337 = vsub.s32 5, %v336
  %v338 = vrot.slane %v34, %v337
  %v339 = vmul.f32 %v305, %v338
  %v340 = vmul.f32 %v309, %v338
  %v341 = vmul.f32 %v313, %v338
  %v342 = vmul.f32 %v317, %v338
  %v343 = vmul.f32 %v321, %v338
  %v344 = vmul.f32 %v325, %v338
  %v345 = vmul.f32 %v329, %v338
  %v346 = vmul.f32 %v333, %v338
  %v347 = vadd.f32 %v295, %v339
  %v348 = vadd.f32 %v296, %v340
  %v349 = vadd.f32 %v297, %v341
  %v350 = vadd.f32 %v298, %v342
  %v351 = vadd.f32 %v299, %v343
  %v352 = vadd.f32 %v300, %v344
  %v353 = vadd.f32 %v301, %v345
  %v354 = vadd.f32 %v302, %v346
  %v355 = vld [vmem:[%s2] sm:$0xff]
  %v356 = vld [vmem:[%s2 + $0x8] sm:$0xff]
  %v357 = vld [vmem:[%s2 + $0x10] sm:$0xff]
  %v358 = vld [vmem:[%s2 + $0x18] sm:$0xff]
  %v359 = vld [vmem:[%s2 + $0x20] sm:$0xff]
  %v360 = vld [vmem:[%s2 + $0x28] sm:$0xff]
  %v361 = vld [vmem:[%s2 + $0x30] sm:$0xff]
  %v362 = vld [vmem:[%s2 + $0x38] sm:$0xff]
  %364 = vset.pattern.permute.xlu0 0
  %365 = vperm.xlu0 %364, %v355
  %v366 = vpop.permute.xlu0 %365
  %369 = vset.pattern.permute.xlu0 0
  %370 = vperm.xlu0 %369, %v356
  %v371 = vpop.permute.xlu0 %370
  %374 = vset.pattern.permute.xlu0 0
  %375 = vperm.xlu0 %374, %v357
  %v376 = vpop.permute.xlu0 %375
  %379 = vset.pattern.permute.xlu0 0
  %380 = vperm.xlu0 %379, %v358
  %v381 = vpop.permute.xlu0 %380
  %384 = vset.pattern.permute.xlu0 0
  %385 = vperm.xlu0 %384, %v359
  %v386 = vpop.permute.xlu0 %385
  %389 = vset.pattern.permute.xlu0 0
  %390 = vperm.xlu0 %389, %v360
  %v391 = vpop.permute.xlu0 %390
  %394 = vset.pattern.permute.xlu0 0
  %395 = vperm.xlu0 %394, %v361
  %v396 = vpop.permute.xlu0 %395
  %399 = vset.pattern.permute.xlu0 0
  %400 = vperm.xlu0 %399, %v362
  %v401 = vpop.permute.xlu0 %400
  %v403 = vadd.f32 %v347, %v366
  %v404 = vadd.f32 %v348, %v371
  %v405 = vadd.f32 %v349, %v376
  %v406 = vadd.f32 %v350, %v381
  %v407 = vadd.f32 %v351, %v386
  %v408 = vadd.f32 %v352, %v391
  %v409 = vadd.f32 %v353, %v396
  %v410 = vadd.f32 %v354, %v401
  %v411 = vtanh.pop %v403
  %v412 = vtanh.pop %v404
  %v413 = vtanh.pop %v405
  %v414 = vtanh.pop %v406
  %v415 = vtanh.pop %v407
  %v416 = vtanh.pop %v408
  %v417 = vtanh.pop %v409
  %v418 = vtanh.pop %v410
  %v419 = vld [vmem:[%s3] sm:$0xff]
  %v420 = vld [vmem:[%s3 + $0x8] sm:$0xff]
  %v421 = vld [vmem:[%s3 + $0x10] sm:$0xff]
  %v422 = vld [vmem:[%s3 + $0x18] sm:$0xff]
  %v423 = vld [vmem:[%s3 + $0x20] sm:$0xff]
  %v424 = vld [vmem:[%s3 + $0x28] sm:$0xff]
  %v425 = vld [vmem:[%s3 + $0x30] sm:$0xff]
  %v426 = vld [vmem:[%s3 + $0x38] sm:$0xff]
  %v427 = vld [vmem:[%s3 + $0x40] sm:$0xff]
  %v428 = vld [vmem:[%s3 + $0x48] sm:$0xff]
  %v429 = vld [vmem:[%s3 + $0x50] sm:$0xff]
  %v430 = vld [vmem:[%s3 + $0x58] sm:$0xff]
  %v431 = vld [vmem:[%s3 + $0x60] sm:$0xff]
  %v432 = vld [vmem:[%s3 + $0x68] sm:$0xff]
  %v433 = vld [vmem:[%s3 + $0x70] sm:$0xff]
  %v434 = vld [vmem:[%s3 + $0x78] sm:$0xff]
  %v435 = vld [vmem:[%s4] sm:$0xff]
  %v436 = vld [vmem:[%s4 + $0x8] sm:$0xff]
  %v437 = vld [vmem:[%s4 + $0x10] sm:$0xff]
  %v438 = vld [vmem:[%s4 + $0x18] sm:$0xff]
  %v439 = vld [vmem:[%s4 + $0x20] sm:$0xff]
  %v440 = vld [vmem:[%s4 + $0x28] sm:$0xff]
  %v441 = vld [vmem:[%s4 + $0x30] sm:$0xff]
  %v442 = vld [vmem:[%s4 + $0x38] sm:$0xff]
  %v443 = vld [vmem:[%s4 + $0x40] sm:$0xff]
  %v444 = vld [vmem:[%s4 + $0x48] sm:$0xff]
  %v445 = vld [vmem:[%s4 + $0x50] sm:$0xff]
  %v446 = vld [vmem:[%s4 + $0x58] sm:$0xff]
  %v447 = vld [vmem:[%s4 + $0x60] sm:$0xff]
  %v448 = vld [vmem:[%s4 + $0x68] sm:$0xff]
  %v449 = vld [vmem:[%s4 + $0x70] sm:$0xff]
  %v450 = vld [vmem:[%s4 + $0x78] sm:$0xff]
  %452 = vset.pattern.permute.xlu0 0
  %453 = vperm.xlu0 %452, %v435
  %v454 = vpop.permute.xlu0 %453
  %457 = vset.pattern.permute.xlu0 0
  %458 = vperm.xlu0 %457, %v436
  %v459 = vpop.permute.xlu0 %458
  %462 = vset.pattern.permute.xlu0 0
  %463 = vperm.xlu0 %462, %v437
  %v464 = vpop.permute.xlu0 %463
  %467 = vset.pattern.permute.xlu0 0
  %468 = vperm.xlu0 %467, %v438
  %v469 = vpop.permute.xlu0 %468
  %472 = vset.pattern.permute.xlu0 0
  %473 = vperm.xlu0 %472, %v439
  %v474 = vpop.permute.xlu0 %473
  %477 = vset.pattern.permute.xlu0 0
  %478 = vperm.xlu0 %477, %v440
  %v479 = vpop.permute.xlu0 %478
  %482 = vset.pattern.permute.xlu0 0
  %483 = vperm.xlu0 %482, %v441
  %v484 = vpop.permute.xlu0 %483
  %487 = vset.pattern.permute.xlu0 0
  %488 = vperm.xlu0 %487, %v442
  %v489 = vpop.permute.xlu0 %488
  %492 = vset.pattern.permute.xlu0 0
  %493 = vperm.xlu0 %492, %v443
  %v494 = vpop.permute.xlu0 %493
  %497 = vset.pattern.permute.xlu0 0
  %498 = vperm.xlu0 %497, %v444
  %v499 = vpop.permute.xlu0 %498
  %502 = vset.pattern.permute.xlu0 0
  %503 = vperm.xlu0 %502, %v445
  %v504 = vpop.permute.xlu0 %503
  %507 = vset.pattern.permute.xlu0 0
  %508 = vperm.xlu0 %507, %v446
  %v509 = vpop.permute.xlu0 %508
  %512 = vset.pattern.permute.xlu0 0
  %513 = vperm.xlu0 %512, %v447
  %v514 = vpop.permute.xlu0 %513
  %517 = vset.pattern.permute.xlu0 0
  %518 = vperm.xlu0 %517, %v448
  %v519 = vpop.permute.xlu0 %518
  %522 = vset.pattern.permute.xlu0 0
  %523 = vperm.xlu0 %522, %v449
  %v524 = vpop.permute.xlu0 %523
  %527 = vset.pattern.permute.xlu0 0
  %528 = vperm.xlu0 %527, %v450
  %v529 = vpop.permute.xlu0 %528
  %vm531 = vcmask 523264
  %v533 = vsel %vm531, %v419, 0
  %v536 = vsel %vm531, %v420, 0
  %v539 = vsel %vm531, %v421, 0
  %v542 = vsel %vm531, %v422, 0
  %v545 = vsel %vm531, %v423, 0
  %v548 = vsel %vm531, %v424, 0
  %v551 = vsel %vm531, %v425, 0
  %v554 = vsel %vm531, %v426, 0
  %v557 = vsel %vm531, %v427, 0
  %v560 = vsel %vm531, %v428, 0
  %v563 = vsel %vm531, %v429, 0
  %v566 = vsel %vm531, %v430, 0
  %v569 = vsel %vm531, %v431, 0
  %v572 = vsel %vm531, %v432, 0
  %v575 = vsel %vm531, %v433, 0
  %v578 = vsel %vm531, %v434, 0
  %580 = vmatprep.subr.mxu0 0.0
  %581 = vmatpush1.msra.mxu0 0.0
  %582 = vmatprep.subr.mxu0 0.0
  %583 = vmatpush1.msra.mxu0 0.0
  %584 = vmatprep.subr.mxu0 0.0
  %585 = vmatpush1.msra.mxu0 0.0
  %586 = vmatprep.subr.mxu0 0.0
  %587 = vmatpush1.msra.mxu0 0.0
  %588 = vmatprep.subr.mxu0 0.0
  %589 = vmatpush1.msra.mxu0 0.0
  %590 = vmatprep.subr.mxu0 0.0
  %591 = vmatpush1.msra.mxu0 0.0
  %592 = vmatprep.subr.mxu0 0.0
  %593 = vmatpush1.msra.mxu0 0.0
  %594 = vmatprep.subr.mxu0 0.0
  %595 = vmatpush1.msra.mxu0 0.0
  %596 = vmatprep.subr.mxu0 0.0
  %597 = vmatpush1.msra.mxu0 %v418
  %598 = vmatprep.subr.mxu0 0.0
  %599 = vmatpush1.msra.mxu0 %v417
  %600 = vmatprep.subr.mxu0 0.0
  %601 = vmatpush1.msra.mxu0 %v416
  %602 = vmatprep.subr.mxu0 0.0
  %603 = vmatpush1.msra.mxu0 %v415
  %604 = vmatprep.subr.mxu0 0.0
  %605 = vmatpush1.msra.mxu0 %v414
  %606 = vmatprep.subr.mxu0 0.0
  %607 = vmatpush1.msra.mxu0 %v413
  %608 = vmatprep.subr.mxu0 0.0
  %609 = vmatpush1.msra.mxu0 %v412
  %610 = vmatprep.subr.mxu0 0.0
  %611 = vmatpush1.msra.mxu0 %v411
  %612 = vmatprep.subr.mxu0 0.0
  %613 = vmatpush2.msra.mxu0 0.0
  %614 = vmatprep.subr.mxu0 0.0
  %615 = vmatpush2.msra.mxu0 0.0
  %616 = vmatprep.subr.mxu0 0.0
  %617 = vmatpush2.msra.mxu0 0.0
  %618 = vmatprep.subr.mxu0 0.0
  %619 = vmatpush2.msra.mxu0 0.0
  %620 = vmatprep.subr.mxu0 0.0
  %621 = vmatpush2.msra.mxu0 0.0
  %622 = vmatprep.subr.mxu0 0.0
  %623 = vmatpush2.msra.mxu0 0.0
  %624 = vmatprep.subr.mxu0 0.0
  %625 = vmatpush2.msra.mxu0 0.0
  %626 = vmatprep.subr.mxu0 0.0
  %627 = vmatpush2.msra.mxu0 0.0
  %628 = vmatprep.subr.mxu0 0.0
  %629 = vmatpush2.msra.mxu0 0.0
  %630 = vmatprep.subr.mxu0 0.0
  %631 = vmatpush2.msra.mxu0 0.0
  %632 = vmatprep.subr.mxu0 0.0
  %633 = vmatpush2.msra.mxu0 0.0
  %634 = vmatprep.subr.mxu0 0.0
  %635 = vmatpush2.msra.mxu0 0.0
  %636 = vmatprep.subr.mxu0 0.0
  %637 = vmatpush2.msra.mxu0 0.0
  %638 = vmatprep.subr.mxu0 0.0
  %639 = vmatpush2.msra.mxu0 0.0
  %640 = vmatprep.subr.mxu0 0.0
  %641 = vmatpush2.msra.mxu0 0.0
  %642 = vmatprep.subr.mxu0 0.0
  %643 = vmatpush2.msra.mxu0 0.0
  %644 = vmatprep.mubr.f32.mxu0 0.0
  %645 = vmatmul.mubr.f32.gmra.mxu0 %v533
  %v646 = vpop.f32.mrf.mxu0
  %v647 = vadd.f32 %v454, %v646
  %v648 = vpop.f32.mrf.mxu0
  %649 = vmatprep.mubr.f32.mxu0 0.0
  %650 = vmatmul.mubr.f32.gmra.mxu0 %v536
  %v651 = vpop.f32.mrf.mxu0
  %v652 = vadd.f32 %v459, %v651
  %v653 = vpop.f32.mrf.mxu0
  %654 = vmatprep.mubr.f32.mxu0 0.0
  %655 = vmatmul.mubr.f32.gmra.mxu0 %v539
  %v656 = vpop.f32.mrf.mxu0
  %v657 = vadd.f32 %v464, %v656
  %v658 = vpop.f32.mrf.mxu0
  %659 = vmatprep.mubr.f32.mxu0 0.0
  %660 = vmatmul.mubr.f32.gmra.mxu0 %v542
  %v661 = vpop.f32.mrf.mxu0
  %v662 = vadd.f32 %v469, %v661
  %v663 = vpop.f32.mrf.mxu0
  %664 = vmatprep.mubr.f32.mxu0 0.0
  %665 = vmatmul.mubr.f32.gmra.mxu0 %v545
  %v666 = vpop.f32.mrf.mxu0
  %v667 = vadd.f32 %v474, %v666
  %v668 = vpop.f32.mrf.mxu0
  %669 = vmatprep.mubr.f32.mxu0 0.0
  %670 = vmatmul.mubr.f32.gmra.mxu0 %v548
  %v671 = vpop.f32.mrf.mxu0
  %v672 = vadd.f32 %v479, %v671
  %v673 = vpop.f32.mrf.mxu0
  %674 = vmatprep.mubr.f32.mxu0 0.0
  %675 = vmatmul.mubr.f32.gmra.mxu0 %v551
  %v676 = vpop.f32.mrf.mxu0
  %v677 = vadd.f32 %v484, %v676
  %v678 = vpop.f32.mrf.mxu0
  %679 = vmatprep.mubr.f32.mxu0 0.0
  %680 = vmatmul.mubr.f32.gmra.mxu0 %v554
  %v681 = vpop.f32.mrf.mxu0
  %v682 = vadd.f32 %v489, %v681
  %v683 = vpop.f32.mrf.mxu0
  %684 = vmatprep.mubr.f32.mxu0 0.0
  %685 = vmatmul.mubr.f32.gmra.mxu0 %v557
  %v686 = vpop.f32.mrf.mxu0
  %v687 = vadd.f32 %v494, %v686
  %v688 = vpop.f32.mrf.mxu0
  %689 = vmatprep.mubr.f32.mxu0 0.0
  %690 = vmatmul.mubr.f32.gmra.mxu0 %v560
  %v691 = vpop.f32.mrf.mxu0
  %v692 = vadd.f32 %v499, %v691
  %v693 = vpop.f32.mrf.mxu0
  %694 = vmatprep.mubr.f32.mxu0 0.0
  %695 = vmatmul.mubr.f32.gmra.mxu0 %v563
  %v696 = vpop.f32.mrf.mxu0
  %v697 = vadd.f32 %v504, %v696
  %v698 = vpop.f32.mrf.mxu0
  %699 = vmatprep.mubr.f32.mxu0 0.0
  %700 = vmatmul.mubr.f32.gmra.mxu0 %v566
  %v701 = vpop.f32.mrf.mxu0
  %v702 = vadd.f32 %v509, %v701
  %v703 = vpop.f32.mrf.mxu0
  %704 = vmatprep.mubr.f32.mxu0 0.0
  %705 = vmatmul.mubr.f32.gmra.mxu0 %v569
  %v706 = vpop.f32.mrf.mxu0
  %v707 = vadd.f32 %v514, %v706
  %v708 = vpop.f32.mrf.mxu0
  %709 = vmatprep.mubr.f32.mxu0 0.0
  %710 = vmatmul.mubr.f32.gmra.mxu0 %v572
  %v711 = vpop.f32.mrf.mxu0
  %v712 = vadd.f32 %v519, %v711
  %v713 = vpop.f32.mrf.mxu0
  %714 = vmatprep.mubr.f32.mxu0 0.0
  %715 = vmatmul.mubr.f32.gmra.mxu0 %v575
  %v716 = vpop.f32.mrf.mxu0
  %v717 = vadd.f32 %v524, %v716
  %v718 = vpop.f32.mrf.mxu0
  %719 = vmatprep.mubr.f32.mxu0 0.0
  %720 = vmatmul.mubr.f32.gmra.mxu0 %v578
  %v721 = vpop.f32.mrf.mxu0
  %v722 = vadd.f32 %v529, %v721
  %v723 = vpop.f32.mrf.mxu0
  %724 = vdwg.mxu0
  %v725 = vtanh.pop %v647
  %v726 = vtanh.pop %v652
  %v727 = vtanh.pop %v657
  %v728 = vtanh.pop %v662
  %v729 = vtanh.pop %v667
  %v730 = vtanh.pop %v672
  %v731 = vtanh.pop %v677
  %v732 = vtanh.pop %v682
  %v733 = vtanh.pop %v687
  %v734 = vtanh.pop %v692
  %v735 = vtanh.pop %v697
  %v736 = vtanh.pop %v702
  %v737 = vtanh.pop %v707
  %v738 = vtanh.pop %v712
  %v739 = vtanh.pop %v717
  %v740 = vtanh.pop %v722
  %v741 = vld [vmem:[%s5] sm:$0xff]
  %v742 = vld [vmem:[%s5 + $0x8] sm:$0xff]
  %v743 = vld [vmem:[%s5 + $0x10] sm:$0xff]
  %v744 = vld [vmem:[%s5 + $0x18] sm:$0xff]
  %v745 = vld [vmem:[%s5 + $0x20] sm:$0xff]
  %v746 = vld [vmem:[%s5 + $0x28] sm:$0xff]
  %v747 = vld [vmem:[%s5 + $0x30] sm:$0xff]
  %v748 = vld [vmem:[%s5 + $0x38] sm:$0xff]
  %v749 = vld [vmem:[%s6] sm:$0xff]
  %v750 = vld [vmem:[%s6 + $0x8] sm:$0xff]
  %v751 = vld [vmem:[%s6 + $0x10] sm:$0xff]
  %v752 = vld [vmem:[%s6 + $0x18] sm:$0xff]
  %v753 = vld [vmem:[%s6 + $0x20] sm:$0xff]
  %v754 = vld [vmem:[%s6 + $0x28] sm:$0xff]
  %v755 = vld [vmem:[%s6 + $0x30] sm:$0xff]
  %v756 = vld [vmem:[%s6 + $0x38] sm:$0xff]
  %758 = vset.pattern.permute.xlu0 0
  %759 = vperm.xlu0 %758, %v749
  %v760 = vpop.permute.xlu0 %759
  %763 = vset.pattern.permute.xlu0 0
  %764 = vperm.xlu0 %763, %v750
  %v765 = vpop.permute.xlu0 %764
  %768 = vset.pattern.permute.xlu0 0
  %769 = vperm.xlu0 %768, %v751
  %v770 = vpop.permute.xlu0 %769
  %773 = vset.pattern.permute.xlu0 0
  %774 = vperm.xlu0 %773, %v752
  %v775 = vpop.permute.xlu0 %774
  %778 = vset.pattern.permute.xlu0 0
  %779 = vperm.xlu0 %778, %v753
  %v780 = vpop.permute.xlu0 %779
  %783 = vset.pattern.permute.xlu0 0
  %784 = vperm.xlu0 %783, %v754
  %v785 = vpop.permute.xlu0 %784
  %788 = vset.pattern.permute.xlu0 0
  %789 = vperm.xlu0 %788, %v755
  %v790 = vpop.permute.xlu0 %789
  %793 = vset.pattern.permute.xlu0 0
  %794 = vperm.xlu0 %793, %v756
  %v795 = vpop.permute.xlu0 %794
  %797 = vmatprep.subr.mxu0 0.0
  %798 = vmatpush1.msra.mxu0 %v740
  %799 = vmatprep.subr.mxu0 0.0
  %800 = vmatpush1.msra.mxu0 %v739
  %801 = vmatprep.subr.mxu0 0.0
  %802 = vmatpush1.msra.mxu0 %v738
  %803 = vmatprep.subr.mxu0 0.0
  %804 = vmatpush1.msra.mxu0 %v737
  %805 = vmatprep.subr.mxu0 0.0
  %806 = vmatpush1.msra.mxu0 %v736
  %807 = vmatprep.subr.mxu0 0.0
  %808 = vmatpush1.msra.mxu0 %v735
  %809 = vmatprep.subr.mxu0 0.0
  %810 = vmatpush1.msra.mxu0 %v734
  %811 = vmatprep.subr.mxu0 0.0
  %812 = vmatpush1.msra.mxu0 %v733
  %813 = vmatprep.subr.mxu0 0.0
  %814 = vmatpush1.msra.mxu0 %v732
  %815 = vmatprep.subr.mxu0 0.0
  %816 = vmatpush1.msra.mxu0 %v731
  %817 = vmatprep.subr.mxu0 0.0
  %818 = vmatpush1.msra.mxu0 %v730
  %819 = vmatprep.subr.mxu0 0.0
  %820 = vmatpush1.msra.mxu0 %v729
  %821 = vmatprep.subr.mxu0 0.0
  %822 = vmatpush1.msra.mxu0 %v728
  %823 = vmatprep.subr.mxu0 0.0
  %824 = vmatpush1.msra.mxu0 %v727
  %825 = vmatprep.subr.mxu0 0.0
  %826 = vmatpush1.msra.mxu0 %v726
  %827 = vmatprep.subr.mxu0 0.0
  %828 = vmatpush1.msra.mxu0 %v725
  %829 = vmatprep.subr.mxu0 0.0
  %830 = vmatpush2.msra.mxu0 0.0
  %831 = vmatprep.subr.mxu0 0.0
  %832 = vmatpush2.msra.mxu0 0.0
  %833 = vmatprep.subr.mxu0 0.0
  %834 = vmatpush2.msra.mxu0 0.0
  %835 = vmatprep.subr.mxu0 0.0
  %836 = vmatpush2.msra.mxu0 0.0
  %837 = vmatprep.subr.mxu0 0.0
  %838 = vmatpush2.msra.mxu0 0.0
  %839 = vmatprep.subr.mxu0 0.0
  %840 = vmatpush2.msra.mxu0 0.0
  %841 = vmatprep.subr.mxu0 0.0
  %842 = vmatpush2.msra.mxu0 0.0
  %843 = vmatprep.subr.mxu0 0.0
  %844 = vmatpush2.msra.mxu0 0.0
  %845 = vmatprep.subr.mxu0 0.0
  %846 = vmatpush2.msra.mxu0 0.0
  %847 = vmatprep.subr.mxu0 0.0
  %848 = vmatpush2.msra.mxu0 0.0
  %849 = vmatprep.subr.mxu0 0.0
  %850 = vmatpush2.msra.mxu0 0.0
  %851 = vmatprep.subr.mxu0 0.0
  %852 = vmatpush2.msra.mxu0 0.0
  %853 = vmatprep.subr.mxu0 0.0
  %854 = vmatpush2.msra.mxu0 0.0
  %855 = vmatprep.subr.mxu0 0.0
  %856 = vmatpush2.msra.mxu0 0.0
  %857 = vmatprep.subr.mxu0 0.0
  %858 = vmatpush2.msra.mxu0 0.0
  %859 = vmatprep.subr.mxu0 0.0
  %860 = vmatpush2.msra.mxu0 0.0
  %861 = vmatprep.mubr.f32.mxu0 0.0
  %862 = vmatmul.mubr.f32.gmra.mxu0 %v741
  %v863 = vpop.f32.mrf.mxu0
  %v864 = vadd.f32 %v760, %v863
  %v865 = vpop.f32.mrf.mxu0
  %866 = vmatprep.mubr.f32.mxu0 0.0
  %867 = vmatmul.mubr.f32.gmra.mxu0 %v742
  %v868 = vpop.f32.mrf.mxu0
  %v869 = vadd.f32 %v765, %v868
  %v870 = vpop.f32.mrf.mxu0
  %871 = vmatprep.mubr.f32.mxu0 0.0
  %872 = vmatmul.mubr.f32.gmra.mxu0 %v743
  %v873 = vpop.f32.mrf.mxu0
  %v874 = vadd.f32 %v770, %v873
  %v875 = vpop.f32.mrf.mxu0
  %876 = vmatprep.mubr.f32.mxu0 0.0
  %877 = vmatmul.mubr.f32.gmra.mxu0 %v744
  %v878 = vpop.f32.mrf.mxu0
  %v879 = vadd.f32 %v775, %v878
  %v880 = vpop.f32.mrf.mxu0
  %881 = vmatprep.mubr.f32.mxu0 0.0
  %882 = vmatmul.mubr.f32.gmra.mxu0 %v745
  %v883 = vpop.f32.mrf.mxu0
  %v884 = vadd.f32 %v780, %v883
  %v885 = vpop.f32.mrf.mxu0
  %886 = vmatprep.mubr.f32.mxu0 0.0
  %887 = vmatmul.mubr.f32.gmra.mxu0 %v746
  %v888 = vpop.f32.mrf.mxu0
  %v889 = vadd.f32 %v785, %v888
  %v890 = vpop.f32.mrf.mxu0
  %891 = vmatprep.mubr.f32.mxu0 0.0
  %892 = vmatmul.mubr.f32.gmra.mxu0 %v747
  %v893 = vpop.f32.mrf.mxu0
  %v894 = vadd.f32 %v790, %v893
  %v895 = vpop.f32.mrf.mxu0
  %896 = vmatprep.mubr.f32.mxu0 0.0
  %897 = vmatmul.mubr.f32.gmra.mxu0 %v748
  %v898 = vpop.f32.mrf.mxu0
  %v899 = vadd.f32 %v795, %v898
  %v900 = vpop.f32.mrf.mxu0
  %901 = vdwg.mxu0
  %v902 = vtanh.pop %v864
  %v903 = vtanh.pop %v869
  %v904 = vtanh.pop %v874
  %v905 = vtanh.pop %v879
  %v906 = vtanh.pop %v884
  %v907 = vtanh.pop %v889
  %v908 = vtanh.pop %v894
  %v909 = vtanh.pop %v899
  %v910 = vld [vmem:[%s7] sm:$0xff]
  %v911 = vld [vmem:[%s7 + $0x8] sm:$0xff]
  %v912 = vld [vmem:[%s7 + $0x10] sm:$0xff]
  %v913 = vld [vmem:[%s7 + $0x18] sm:$0xff]
  %v914 = vld [vmem:[%s7 + $0x20] sm:$0xff]
  %v915 = vld [vmem:[%s7 + $0x28] sm:$0xff]
  %v916 = vld [vmem:[%s7 + $0x30] sm:$0xff]
  %v917 = vld [vmem:[%s7 + $0x38] sm:$0xff]
  %919 = vset.pattern.permute.xlu0 0
  %920 = vperm.xlu0 %919, %v910
  %v921 = vpop.permute.xlu0 %920
  %924 = vset.pattern.permute.xlu0 0
  %925 = vperm.xlu0 %924, %v911
  %v926 = vpop.permute.xlu0 %925
  %929 = vset.pattern.permute.xlu0 0
  %930 = vperm.xlu0 %929, %v912
  %v931 = vpop.permute.xlu0 %930
  %934 = vset.pattern.permute.xlu0 0
  %935 = vperm.xlu0 %934, %v913
  %v936 = vpop.permute.xlu0 %935
  %939 = vset.pattern.permute.xlu0 0
  %940 = vperm.xlu0 %939, %v914
  %v941 = vpop.permute.xlu0 %940
  %944 = vset.pattern.permute.xlu0 0
  %945 = vperm.xlu0 %944, %v915
  %v946 = vpop.permute.xlu0 %945
  %949 = vset.pattern.permute.xlu0 0
  %950 = vperm.xlu0 %949, %v916
  %v951 = vpop.permute.xlu0 %950
  %954 = vset.pattern.permute.xlu0 0
  %955 = vperm.xlu0 %954, %v917
  %v956 = vpop.permute.xlu0 %955
  %v958 = vmul.f32 %v902, %v921
  %v959 = vmul.f32 %v903, %v926
  %v960 = vmul.f32 %v904, %v931
  %v961 = vmul.f32 %v905, %v936
  %v962 = vmul.f32 %v906, %v941
  %v963 = vmul.f32 %v907, %v946
  %v964 = vmul.f32 %v908, %v951
  %v965 = vmul.f32 %v909, %v956
  %v966 = vadd.f32 %v958, %v959
  %v967 = vadd.f32 %v966, %v960
  %v968 = vadd.f32 %v967, %v961
  %v969 = vadd.f32 %v968, %v962
  %v970 = vadd.f32 %v969, %v963
  %v971 = vadd.f32 %v970, %v964
  %v972 = vadd.f32 %v971, %v965
  %v973 = vrot.slane %v972, 4
  %v974 = vadd.f32 %v972, %v973
  %v975 = vrot.slane %v974, 2
  %v976 = vadd.f32 %v974, %v975
  %v977 = vrot.slane %v976, 1
  %v978 = vadd.f32 %v976, %v977
  %v979 = vld [vmem:[#allocation2] sm:$0x1]
  %981 = vset.pattern.permute.xlu0 0
  %982 = vperm.xlu0 %981, %v979
  %v983 = vpop.permute.xlu0 %982
  %v985 = vlaneseq
  %v986 = vshrl.u32 %v985, 7
  %v987 = vsub.s32 0, %v986
  %v988 = vrot.slane %v983, %v987
  %v989 = vadd.f32 %v978, %v988
  %v990 = vmul.f32 %v989, 0.5
  %v991 = vtanh.pop %v990
  %v992 = vadd.f32 %v991, 1.0
  %v993 = vmul.f32 %v992, 0.5
  %994 = vst [vmem:[%s9] sm:$0x1] %v993
  // Predicated region
  $region38: #{reachability_predictor.1} parent=0 // pred_check
    _
  $region39: #{reachability_predictor.1} parent=0 // pred_check_branch
    %996 = sbr.rel (0) target = $region41
  $region40: #{reachability_predictor.1} parent=0 // pred_region
    _
  $region41: #{reachability_predictor.1} parent=0 // pred_fallthru
    _
  // Predicated region
  $region42: #{reachability_predictor.1} parent=0 // pred_check
    _
  $region43: #{reachability_predictor.1} parent=0 // pred_check_branch
    %998 = sbr.rel (0) target = $region45
  $region44: #{reachability_predictor.1} parent=0 // pred_region
    _
  $region45: #{reachability_predictor.1} parent=0 // pred_fallthru
    _

</llo_original>
